<compile_context>
chip_gen: v7x
topology: tpu7x:2x2x1
jax: 0.10.0
libtpu: 0.0.40
codegen_flags: <defaults>
</compile_context>

<pallas_src>
import math

import jax
import jax.numpy as jnp
from jax.experimental import pallas as pl
from jax.experimental.pallas import tpu as pltpu


# ----------------------------------------------------------------------------
# Helpers
# ----------------------------------------------------------------------------
def _pick_tile(n, target):
    """Largest tile <= target that divides n (multiple of 8 if actually tiled)."""
    if n <= target:
        return n
    for t in range(target, 7, -8):
        if n % t == 0:
            return t
    return n


# ----------------------------------------------------------------------------
# Stage 1: K / V projections, computed once per batch (not per q-tile)
# ----------------------------------------------------------------------------
def _kv_proj_kernel(k_ref, v_ref, wk_ref, wv_ref, bk_ref, bv_ref,
                    kh_ref, vh_ref):
    kh_ref[0] = (jnp.dot(k_ref[0], wk_ref[...],
                         preferred_element_type=jnp.float32)
                 + bk_ref[...]).astype(kh_ref.dtype)
    vh_ref[0] = (jnp.dot(v_ref[0], wv_ref[...],
                         preferred_element_type=jnp.float32)
                 + bv_ref[...]).astype(vh_ref.dtype)


# ----------------------------------------------------------------------------
# Stage 2: Q projection + per-head attention + fc + residual + LayerNorm
# ----------------------------------------------------------------------------
def _make_mha_kernel(n_head, d_k, d_v, scale, eps, return_attn, compute_dtype):
    def kernel(q_ref, kh_ref, vh_ref, mask_ref,
               wq_ref, bq_ref, wfc_ref, bfc_ref, gamma_ref, beta_ref,
               out_ref, *attn_refs):
        q_blk = q_ref[0]                    # (tq, d_model) f32 — also the residual
        kh_all = kh_ref[0]                  # (len_k, n_head*d_k) compute_dtype
        vh_all = vh_ref[0]                  # (len_k, n_head*d_v) compute_dtype

        # Q projection (f32 accumulation), 1/sqrt(d_k) folded in, then cast so
        # the QK^T matmul actually runs with compute_dtype operands.
        qh_all = (jnp.dot(q_blk.astype(compute_dtype), wq_ref[...],
                          preferred_element_type=jnp.float32)
                  + bq_ref[...]) * scale
        qh_all = qh_all.astype(compute_dtype)        # (tq, n_head*d_k)

        # Additive mask bias shared by all heads.  mask block is either
        # (1, len_k) (key-padding) or (tq, len_k) (full mask); both broadcast.
        # Large finite negative instead of -inf: a fully-masked row gives a
        # uniform distribution, not NaN.
        mask_bias = jnp.where(mask_ref[0] != 0,
                              jnp.float32(-1e30), jnp.float32(0.0))

        ctx_parts = []
        for h in range(n_head):
            qh = qh_all[:, h * d_k:(h + 1) * d_k]    # (tq, d_k)
            kh = kh_all[:, h * d_k:(h + 1) * d_k]    # (len_k, d_k)
            vh = vh_all[:, h * d_v:(h + 1) * d_v]    # (len_k, d_v)

            # scores = qh @ kh^T (contract d_k axes, no explicit transpose).
            scores = jax.lax.dot_general(
                qh, kh, (((1,), (1,)), ((), ())),
                preferred_element_type=jnp.float32)  # (tq, len_k)
            scores = scores + mask_bias

            m = jnp.max(scores, axis=-1, keepdims=True)
            p = jnp.exp(scores - m)
            denom = jnp.sum(p, axis=-1, keepdims=True)

            if return_attn:
                # attn is consumed downstream -> exact reciprocal for it.
                inv = 1.0 / denom
                attn_refs[0][h, 0] = (p * inv).astype(attn_refs[0].dtype)
            else:
                inv = pl.reciprocal(denom, approx=True)   # EUP slot

            # PV matmul with compute_dtype probabilities; scale the small
            # (tq, d_v) context instead of the (tq, len_k) probabilities.
            ctx_h = jnp.dot(p.astype(compute_dtype), vh,
                            preferred_element_type=jnp.float32) * inv
            ctx_parts.append(ctx_h)

        # One full-depth fc matmul (contracts n_head*d_v at once).
        ctx_cat = jnp.concatenate(ctx_parts, axis=-1)     # (tq, n_head*d_v) f32
        y = q_blk + bfc_ref[...] + jnp.dot(
            ctx_cat.astype(compute_dtype), wfc_ref[...],
            preferred_element_type=jnp.float32)

        # LayerNorm over d_model (eps matches nn.LayerNorm default).
        mean = jnp.mean(y, axis=-1, keepdims=True)
        var = jnp.mean(jnp.square(y - mean), axis=-1, keepdims=True)
        yhat = (y - mean) * jax.lax.rsqrt(var + eps)
        out_ref[0] = (yhat * gamma_ref[...] + beta_ref[...]).astype(out_ref.dtype)

    return kernel


# ----------------------------------------------------------------------------
# Wrapper
# ----------------------------------------------------------------------------
def multi_head_attention(q, k, v, mask, params, *, n_head, d_k, d_v,
                         q_tile=None, kv_tile=None,
                         compute_dtype=jnp.bfloat16,
                         return_attn=False, attn_dtype=jnp.bfloat16):
    sz_b, len_q, d_model = q.shape
    _, len_k, _ = k.shape

    # mask: (sz_b, 1, len_k) key-padding or (sz_b, len_q, len_k) full; nonzero = masked.
    assert mask.shape[0] == sz_b and mask.shape[2] == len_k
    mask_rows = mask.shape[1]
    assert mask_rows in (1, len_q)
    mask_i8 = (mask != 0).astype(jnp.int8)

    tq = q_tile if q_tile is not None else _pick_tile(len_q, 256)
    assert len_q % tq == 0
    n_qt = len_q // tq
    tkv = kv_tile if kv_tile is not None else _pick_tile(len_k, 512)
    assert len_k % tkv == 0
    n_kt = len_k // tkv

    scale = 1.0 / math.sqrt(d_k)
    eps = 1e-5
    cd = compute_dtype
    h_dk = n_head * d_k
    h_dv = n_head * d_v

    # Weights stored as (in_features, out_features); all heads concatenated
    # along the output-feature axis (head-major), matching torch's .view split.
    wq = params["wq"].astype(cd)                       # (d_model, n_head*d_k)
    wk = params["wk"].astype(cd)
    wv = params["wv"].astype(cd)                       # (d_model, n_head*d_v)
    bq = params["bq"].reshape(1, h_dk).astype(jnp.float32)
    bk = params["bk"].reshape(1, h_dk).astype(jnp.float32)
    bv = params["bv"].reshape(1, h_dv).astype(jnp.float32)
    wfc = params["wfc"].astype(cd)                     # (n_head*d_v, d_model)
    bfc = params["bfc"].reshape(1, d_model).astype(jnp.float32)
    gamma = params["gamma"].reshape(1, d_model).astype(jnp.float32)
    beta = params["beta"].reshape(1, d_model).astype(jnp.float32)

    # ---------------- Stage 1: project K and V once per batch ----------------
    kh_all, vh_all = pl.pallas_call(
        _kv_proj_kernel,
        out_shape=(jax.ShapeDtypeStruct((sz_b, len_k, h_dk), cd),
                   jax.ShapeDtypeStruct((sz_b, len_k, h_dv), cd)),
        grid_spec=pltpu.PrefetchScalarGridSpec(
            num_scalar_prefetch=0,
            grid=(sz_b, n_kt),
            in_specs=[
                pl.BlockSpec((1, tkv, d_model), lambda b, s: (b, s, 0)),  # k
                pl.BlockSpec((1, tkv, d_model), lambda b, s: (b, s, 0)),  # v
                pl.BlockSpec((d_model, h_dk), lambda b, s: (0, 0)),       # wk
                pl.BlockSpec((d_model, h_dv), lambda b, s: (0, 0)),       # wv
                pl.BlockSpec((1, h_dk), lambda b, s: (0, 0)),             # bk
                pl.BlockSpec((1, h_dv), lambda b, s: (0, 0)),             # bv
            ],
            out_specs=[
                pl.BlockSpec((1, tkv, h_dk), lambda b, s: (b, s, 0)),
                pl.BlockSpec((1, tkv, h_dv), lambda b, s: (b, s, 0)),
            ],
        ),
        compiler_params=pltpu.CompilerParams(
            dimension_semantics=("parallel", "parallel")),
    )(k.astype(cd), v.astype(cd), wk, wv, bk, bv)

    # ---------------- Stage 2: fused attention + fc + residual + LN ----------
    kernel = _make_mha_kernel(n_head, d_k, d_v, scale, eps, return_attn, cd)

    if return_attn:
        out_shape = (
            jax.ShapeDtypeStruct((sz_b, len_q, d_model), jnp.float32),
            jax.ShapeDtypeStruct((n_head, sz_b, len_q, len_k), attn_dtype),
        )
        out_specs = [
            pl.BlockSpec((1, tq, d_model), lambda b, t: (b, t, 0)),
            pl.BlockSpec((n_head, 1, tq, len_k), lambda b, t: (0, b, t, 0)),
        ]
    else:
        out_shape = jax.ShapeDtypeStruct((sz_b, len_q, d_model), jnp.float32)
        out_specs = pl.BlockSpec((1, tq, d_model), lambda b, t: (b, t, 0))

    if mask_rows == 1:
        mask_spec = pl.BlockSpec((1, 1, len_k), lambda b, t: (b, 0, 0))
    else:
        mask_spec = pl.BlockSpec((1, tq, len_k), lambda b, t: (b, t, 0))

    in_specs = [
        pl.BlockSpec((1, tq, d_model), lambda b, t: (b, t, 0)),        # q
        pl.BlockSpec((1, len_k, h_dk), lambda b, t: (b, 0, 0)),        # kh_all
        pl.BlockSpec((1, len_k, h_dv), lambda b, t: (b, 0, 0)),        # vh_all
        mask_spec,                                                     # mask (int8)
        pl.BlockSpec((d_model, h_dk), lambda b, t: (0, 0)),            # wq
        pl.BlockSpec((1, h_dk), lambda b, t: (0, 0)),                  # bq
        pl.BlockSpec((h_dv, d_model), lambda b, t: (0, 0)),            # wfc
        pl.BlockSpec((1, d_model), lambda b, t: (0, 0)),               # bfc
        pl.BlockSpec((1, d_model), lambda b, t: (0, 0)),               # gamma
        pl.BlockSpec((1, d_model), lambda b, t: (0, 0)),               # beta
    ]

    # Explicit VMEM budget (double-buffered blocks + in-kernel temporaries),
    # with headroom, clamped so it is valid on v7x (64 MiB physical) too.
    cbytes = jnp.dtype(cd).itemsize
    abytes = jnp.dtype(attn_dtype).itemsize
    est = 0
    est += 2 * tq * d_model * 4                       # q block
    est += 2 * len_k * h_dk * cbytes                  # kh_all block
    est += 2 * len_k * h_dv * cbytes                  # vh_all block
    est += 2 * (1 if mask_rows == 1 else tq) * len_k  # int8 mask block
    est += 2 * d_model * h_dk * cbytes                # wq
    est += 2 * h_dv * d_model * cbytes                # wfc
    est += 2 * 4 * (h_dk + 3 * d_model)               # biases / gamma / beta
    est += 2 * tq * d_model * 4                       # out block
    if return_attn:
        est += 2 * n_head * tq * len_k * abytes       # attn block
    est += 4 * tq * len_k * 4                         # scores / p temporaries
    est += 2 * tq * h_dk * 4 + 2 * tq * d_model * 4   # qh_all / ctx / LN temps
    vmem_limit = int(min(64 * 1024 * 1024, max(32 * 1024 * 1024, est * 3 // 2)))

    results = pl.pallas_call(
        kernel,
        out_shape=out_shape,
        grid_spec=pltpu.PrefetchScalarGridSpec(
            num_scalar_prefetch=0,
            grid=(sz_b, n_qt),               # batch outer, q-tile inner
            in_specs=in_specs,
            out_specs=out_specs,
        ),
        compiler_params=pltpu.CompilerParams(
            dimension_semantics=("parallel", "parallel"),
            vmem_limit_bytes=vmem_limit),
    )(q, kh_all, vh_all, mask_i8, wq, bq, wfc, bfc, gamma, beta)

    if return_attn:
        out, attn = results
        # (n_head, sz_b, len_q, len_k) -> (n_head*sz_b, len_q, len_k): free reshape.
        return out, attn.reshape(n_head * sz_b, len_q, len_k)
    return results, None


# ----------------------------------------------------------------------------
# Pure-JAX reference (mirrors the torch forward) for a self-check
# ----------------------------------------------------------------------------
def _reference(q, k, v, mask, params, *, n_head, d_k, d_v):
    sz_b, len_q, d_model = q.shape
    _, len_k, _ = k.shape
    residual = q
    qh = (q @ params["wq"] + params["bq"]).reshape(sz_b, len_q, n_head, d_k)
    kh = (k @ params["wk"] + params["bk"]).reshape(sz_b, len_k, n_head, d_k)
    vh = (v @ params["wv"] + params["bv"]).reshape(sz_b, len_k, n_head, d_v)
    qh = jnp.transpose(qh, (2, 0, 1, 3))
    kh = jnp.transpose(kh, (2, 0, 1, 3))
    vh = jnp.transpose(vh, (2, 0, 1, 3))
    scores = jnp.einsum("hbqd,hbkd->hbqk", qh, kh) / (d_k ** 0.5)
    scores = jnp.where(mask[None] != 0, -jnp.inf, scores)
    attn = jax.nn.softmax(scores, axis=-1)
    ctx = jnp.einsum("hbqk,hbkd->hbqd", attn, vh)
    ctx_cat = jnp.transpose(ctx, (1, 2, 0, 3)).reshape(sz_b, len_q, n_head * d_v)
    y = ctx_cat @ params["wfc"] + params["bfc"] + residual
    mean = jnp.mean(y, -1, keepdims=True)
    var = jnp.mean((y - mean) ** 2, -1, keepdims=True)
    out = (y - mean) / jnp.sqrt(var + 1e-5) * params["gamma"] + params["beta"]
    # attn broadcast over len_q if mask was key-padding-shaped
    attn = jnp.broadcast_to(attn, (n_head, sz_b, len_q, len_k))
    return out, attn.reshape(n_head * sz_b, len_q, len_k)


if __name__ == "__main__":
    # Small shapes consistent with the module
    n_head, d_model, d_k, d_v = 2, 32, 8, 8
    sz_b, seq = 2, 8

    key = jax.random.PRNGKey(0)
    keys = jax.random.split(key, 12)

    # Deterministic parameter init (synthetic weights, no checkpoint)
    params = {
        "wq": 0.1 * jax.random.normal(keys[0], (d_model, n_head * d_k), jnp.float32),
        "wk": 0.1 * jax.random.normal(keys[1], (d_model, n_head * d_k), jnp.float32),
        "wv": 0.1 * jax.random.normal(keys[2], (d_model, n_head * d_v), jnp.float32),
        "bq": 0.01 * jax.random.normal(keys[3], (n_head * d_k,), jnp.float32),
        "bk": 0.01 * jax.random.normal(keys[4], (n_head * d_k,), jnp.float32),
        "bv": 0.01 * jax.random.normal(keys[5], (n_head * d_v,), jnp.float32),
        "wfc": 0.1 * jax.random.normal(keys[6], (n_head * d_v, d_model), jnp.float32),
        "bfc": 0.01 * jax.random.normal(keys[7], (d_model,), jnp.float32),
        "gamma": jnp.ones((d_model,), jnp.float32),
        "beta": jnp.zeros((d_model,), jnp.float32),
    }

    q = jax.random.normal(keys[8], (sz_b, seq, d_model), jnp.float32)
    k = jax.random.normal(keys[9], (sz_b, seq, d_model), jnp.float32)
    v = jax.random.normal(keys[10], (sz_b, seq, d_model), jnp.float32)

    # Key-padding mask, compact (sz_b, 1, len_k) form: last 2 key positions of
    # batch 1 masked (nonzero = masked).
    mask = jnp.zeros((sz_b, 1, seq), jnp.float32)
    mask = mask.at[1, :, -2:].set(1.0)

    ref_out, ref_attn = _reference(q, k, v, mask, params,
                                   n_head=n_head, d_k=d_k, d_v=d_v)

    # --- strict numerics check: f32 compute, f32 attn, exact reciprocal ------
    out, attn = multi_head_attention(
        q, k, v, mask, params, n_head=n_head, d_k=d_k, d_v=d_v,
        compute_dtype=jnp.float32, return_attn=True, attn_dtype=jnp.float32)
    out = jax.block_until_ready(out)
    attn = jax.block_until_ready(attn)

    assert jnp.allclose(out, ref_out, atol=5e-3, rtol=5e-3), \
        float(jnp.max(jnp.abs(out - ref_out)))
    assert jnp.allclose(attn, ref_attn, atol=5e-3, rtol=5e-3), \
        float(jnp.max(jnp.abs(attn - ref_attn)))

    # --- serving config: bf16 compute, no attention output -------------------
    out_bf16, _ = multi_head_attention(
        q, k, v, mask, params, n_head=n_head, d_k=d_k, d_v=d_v)
    out_bf16 = jax.block_until_ready(out_bf16)
    assert jnp.allclose(out_bf16, ref_out, atol=1e-1, rtol=1e-1), \
        float(jnp.max(jnp.abs(out_bf16 - ref_out)))

    print("KERNEL_OK")
</pallas_src>

<mosaic_0001>
module attributes {stable_mosaic.version = 11 : i64} {
  func.func @_kv_proj_kernel(%arg0: i32, %arg1: i32, %arg2: memref<1x8x32xf32, #tpu.memory_space<vmem>>, %arg3: memref<1x8x32xf32, #tpu.memory_space<vmem>>, %arg4: memref<32x16xf32, #tpu.memory_space<vmem>>, %arg5: memref<32x16xf32, #tpu.memory_space<vmem>>, %arg6: memref<1x16xf32, #tpu.memory_space<vmem>>, %arg7: memref<1x16xf32, #tpu.memory_space<vmem>>, %arg8: memref<1x8x16xf32, #tpu.memory_space<vmem>>, %arg9: memref<1x8x16xf32, #tpu.memory_space<vmem>>) attributes {dimension_semantics = [#tpu.dimension_semantics<parallel>, #tpu.dimension_semantics<parallel>], iteration_bounds = array<i64: 2, 1>, scalar_prefetch = 0 : i64, scratch_operands = 0 : i64, tpu.core_type = #tpu.core_type<tc>, window_params = [{transform_indices = @transform_0, window_bounds = array<i64: 1, 8, 32>}, {transform_indices = @transform_1, window_bounds = array<i64: 1, 8, 32>}, {pipeline_mode = #tpu.pipeline_mode<synchronous>, transform_indices = @transform_2, window_bounds = array<i64: 32, 16>}, {pipeline_mode = #tpu.pipeline_mode<synchronous>, transform_indices = @transform_3, window_bounds = array<i64: 32, 16>}, {pipeline_mode = #tpu.pipeline_mode<synchronous>, transform_indices = @transform_4, window_bounds = array<i64: 1, 16>}, {pipeline_mode = #tpu.pipeline_mode<synchronous>, transform_indices = @transform_5, window_bounds = array<i64: 1, 16>}, {transform_indices = @transform_6, window_bounds = array<i64: 1, 8, 16>}, {transform_indices = @transform_7, window_bounds = array<i64: 1, 8, 16>}]} {
    %c0 = arith.constant 0 : index
    %c0_0 = arith.constant 0 : index
    %c0_1 = arith.constant 0 : index
    %0 = vector.load %arg2[%c0, %c0_0, %c0_1] : memref<1x8x32xf32, #tpu.memory_space<vmem>>, vector<1x8x32xf32>
    %1 = vector.shape_cast %0 : vector<1x8x32xf32> to vector<8x32xf32>
    %c0_2 = arith.constant 0 : index
    %c0_3 = arith.constant 0 : index
    %2 = vector.load %arg4[%c0_2, %c0_3] : memref<32x16xf32, #tpu.memory_space<vmem>>, vector<32x16xf32>
    %cst = arith.constant dense<0.000000e+00> : vector<8x16xf32>
    %3 = tpu.matmul %1, %2, %cst {dimension_numbers = #tpu.dot_dimension_numbers<[1], [0], [0], [1], [0, 0, 1, 1], [], []>} : vector<8x32xf32>, vector<32x16xf32>, vector<8x16xf32> -> vector<8x16xf32>
    %c0_4 = arith.constant 0 : index
    %c0_5 = arith.constant 0 : index
    %4 = vector.load %arg6[%c0_4, %c0_5] : memref<1x16xf32, #tpu.memory_space<vmem>>, vector<1x16xf32>
    %5 = vector.broadcast %4 : vector<1x16xf32> to vector<8x16xf32>
    %6 = arith.addf %3, %5 : vector<8x16xf32>
    %c0_6 = arith.constant 0 : index
    %c0_7 = arith.constant 0 : index
    %c0_8 = arith.constant 0 : index
    %7 = vector.load %arg8[%c0_6, %c0_7, %c0_8] : memref<1x8x16xf32, #tpu.memory_space<vmem>>, vector<1x8x16xf32>
    %8 = vector.shape_cast %7 : vector<1x8x16xf32> to vector<8x16xf32>
    %9 = vector.shape_cast %6 : vector<8x16xf32> to vector<1x8x16xf32>
    tpu.vector_store %arg8[%c0_6, %c0_7, %c0_8], %9 {strides = array<i32>} : memref<1x8x16xf32, #tpu.memory_space<vmem>>, vector<1x8x16xf32>,
    %c0_9 = arith.constant 0 : index
    %c0_10 = arith.constant 0 : index
    %c0_11 = arith.constant 0 : index
    %10 = vector.load %arg3[%c0_9, %c0_10, %c0_11] : memref<1x8x32xf32, #tpu.memory_space<vmem>>, vector<1x8x32xf32>
    %11 = vector.shape_cast %10 : vector<1x8x32xf32> to vector<8x32xf32>
    %c0_12 = arith.constant 0 : index
    %c0_13 = arith.constant 0 : index
    %12 = vector.load %arg5[%c0_12, %c0_13] : memref<32x16xf32, #tpu.memory_space<vmem>>, vector<32x16xf32>
    %cst_14 = arith.constant dense<0.000000e+00> : vector<8x16xf32>
    %13 = tpu.matmul %11, %12, %cst_14 {dimension_numbers = #tpu.dot_dimension_numbers<[1], [0], [0], [1], [0, 0, 1, 1], [], []>} : vector<8x32xf32>, vector<32x16xf32>, vector<8x16xf32> -> vector<8x16xf32>
    %c0_15 = arith.constant 0 : index
    %c0_16 = arith.constant 0 : index
    %14 = vector.load %arg7[%c0_15, %c0_16] : memref<1x16xf32, #tpu.memory_space<vmem>>, vector<1x16xf32>
    %15 = vector.broadcast %14 : vector<1x16xf32> to vector<8x16xf32>
    %16 = arith.addf %13, %15 : vector<8x16xf32>
    %c0_17 = arith.constant 0 : index
    %c0_18 = arith.constant 0 : index
    %c0_19 = arith.constant 0 : index
    %17 = vector.load %arg9[%c0_17, %c0_18, %c0_19] : memref<1x8x16xf32, #tpu.memory_space<vmem>>, vector<1x8x16xf32>
    %18 = vector.shape_cast %17 : vector<1x8x16xf32> to vector<8x16xf32>
    %19 = vector.shape_cast %16 : vector<8x16xf32> to vector<1x8x16xf32>
    tpu.vector_store %arg9[%c0_17, %c0_18, %c0_19], %19 {strides = array<i32>} : memref<1x8x16xf32, #tpu.memory_space<vmem>>, vector<1x8x16xf32>,
    return
  }
  func.func @transform_0(%arg0: i32, %arg1: i32) -> (i32, i32, i32) {
    %c0_i32 = arith.constant 0 : i32
    %c0_i32_0 = arith.constant 0 : i32
    return %arg0, %arg1, %c0_i32 : i32, i32, i32
  }
  func.func @transform_1(%arg0: i32, %arg1: i32) -> (i32, i32, i32) {
    %c0_i32 = arith.constant 0 : i32
    %c0_i32_0 = arith.constant 0 : i32
    return %arg0, %arg1, %c0_i32 : i32, i32, i32
  }
  func.func @transform_2(%arg0: i32, %arg1: i32) -> (i32, i32) {
    %c0_i32 = arith.constant 0 : i32
    %c0_i32_0 = arith.constant 0 : i32
    %c0_i32_1 = arith.constant 0 : i32
    return %c0_i32, %c0_i32_0 : i32, i32
  }
  func.func @transform_3(%arg0: i32, %arg1: i32) -> (i32, i32) {
    %c0_i32 = arith.constant 0 : i32
    %c0_i32_0 = arith.constant 0 : i32
    %c0_i32_1 = arith.constant 0 : i32
    return %c0_i32, %c0_i32_0 : i32, i32
  }
  func.func @transform_4(%arg0: i32, %arg1: i32) -> (i32, i32) {
    %c0_i32 = arith.constant 0 : i32
    %c0_i32_0 = arith.constant 0 : i32
    %c0_i32_1 = arith.constant 0 : i32
    return %c0_i32, %c0_i32_0 : i32, i32
  }
  func.func @transform_5(%arg0: i32, %arg1: i32) -> (i32, i32) {
    %c0_i32 = arith.constant 0 : i32
    %c0_i32_0 = arith.constant 0 : i32
    %c0_i32_1 = arith.constant 0 : i32
    return %c0_i32, %c0_i32_0 : i32, i32
  }
  func.func @transform_6(%arg0: i32, %arg1: i32) -> (i32, i32, i32) {
    %c0_i32 = arith.constant 0 : i32
    %c0_i32_0 = arith.constant 0 : i32
    return %arg0, %arg1, %c0_i32 : i32, i32, i32
  }
  func.func @transform_7(%arg0: i32, %arg1: i32) -> (i32, i32, i32) {
    %c0_i32 = arith.constant 0 : i32
    %c0_i32_0 = arith.constant 0 : i32
    return %arg0, %arg1, %c0_i32 : i32, i32, i32
  }
}

</mosaic_0001>

<llo_original>
// kernel: tpu_custom_call.1
$region0: #{tpu_custom_call.1}
  #allocation0 [shape = 'u32[]', space=smem, size = 0x4, offset = 0x4, fixed_abs, tag = 'smem constant byte address 0x4 - core index']
  #allocation1 [shape = 'u32[144,128]{1,0:T(1,128)}', space=vmem, size = 0x12000, scoped, tag = 'internal scratch']
  %s0 = inlined_call_operand.vmem [shape: f32[2,8,32], index: 0, kind: input, shape index: {}]
  %s1 = inlined_call_operand.vmem [shape: f32[2,8,32], index: 1, kind: input, shape index: {}]
  %s2 = inlined_call_operand.vmem [shape: f32[32,16], index: 2, kind: input, shape index: {}]
  %s3 = inlined_call_operand.vmem [shape: f32[32,16], index: 3, kind: input, shape index: {}]
  %s4 = inlined_call_operand.vmem [shape: f32[1,16], index: 4, kind: input, shape index: {}]
  %s5 = inlined_call_operand.vmem [shape: f32[1,16], index: 5, kind: input, shape index: {}]
  %s6 = inlined_call_operand.hbm [shape: f32[2,8,16], index: 6, kind: output, shape index: {0}]
  %s7 = inlined_call_operand.hbm [shape: f32[2,8,16], index: 7, kind: output, shape index: {1}]
  %8 = xla_tuple %s6, %s7
  %s9 = sld [smem:[#allocation0]]
  $region65: #{tpu_custom_call.1} parent=0
    _
  %s11 = ssub.s32 1, %s9
  %s12 = scalar_select 0, %s11, %s9
  $region1: #{tpu_custom_call.1} parent=0
    #allocation2 [shape = 'u8[8192]{0}', space=vmem, size = 0x2000, scoped, tag = 'output window, operand 0']
    #allocation3 [shape = 's32[2]{0}', space=sflag, size = 0x8, scoped, tag = 'scoped memory for tpu_custom_call.1']
    #allocation4 [shape = 'u8[8192]{0}', space=vmem, size = 0x2000, scoped, tag = 'output window, operand 1']
    #allocation5 [shape = 's32[2]{0}', space=sflag, size = 0x8, scoped, tag = 'scoped memory for tpu_custom_call.1']
    %13 = vsyncpa [#allocation3], 0
    %s14 = scalar_lea.sflag [#allocation3], 1
    %15 = vsyncpa %s14, 0
    %16 = vsyncpa [#allocation5], 0
    %s17 = scalar_lea.sflag [#allocation5], 1
    %18 = vsyncpa %s17, 0
    loop: start=0, step=1, limit=4
    $region2: #{tpu_custom_call.1} parent=1 // loop_pre_header
      _
    $region3: #{tpu_custom_call.1} parent=1 // loop_header
      %s20 = sphi 0, %s24
      %p21 = scmp.ge.s32.totalorder %s20, 4
      %s27 = sphi 0, %s39
      %s28 = sphi 0, %s35
      %s29 = sphi 0, %s27
      %s30 = sphi 0, %s28
      %s31 = sphi 0, %s29
      %s32 = sphi 0, %s30
      %s44 = sphi 0, %s46
      %s47 = sphi 0, %s44
      %s48 = sphi 0, %s47
      %s64 = sphi 0, %s48
      %s72 = sphi 0, %s74
      %s75 = sphi 0, %s72
      %s76 = sphi 0, %s75
      %s92 = sphi 0, %s76
      %s96 = sphi 0, %s96
      %s98 = sphi 0, %s96
      %s99 = sphi 0, %s98
      %s113 = sphi 0, %s99
      %s117 = sphi 0, %s117
      %s119 = sphi 0, %s117
      %s120 = sphi 0, %s119
      %s134 = sphi 0, %s120
      %s138 = sphi 0, %s138
      %s140 = sphi 0, %s138
      %s141 = sphi 0, %s140
      %s155 = sphi 0, %s141
      %s159 = sphi 0, %s159
      %s161 = sphi 0, %s159
      %s162 = sphi 0, %s161
      %s176 = sphi 0, %s162
      %s184 = sphi 0, %s186
      %s187 = sphi 0, %s184
      %s188 = sphi 0, %s187
      %s204 = sphi 0, %s188
      %s212 = sphi 0, %s214
      %s215 = sphi 0, %s212
      %s216 = sphi 0, %s215
      %s232 = sphi 0, %s216
    $region4: #{tpu_custom_call.1} parent=1 // loop_header_branch
      %23 = sbr.rel (%p21) target = $region8
    $region5: #{tpu_custom_call.1} parent=1 // loop_body
      %s25 = ssub.s32 %s20, 1
      %s26 = ssub.s32 %s20, 2
      %s33 = sadd.s32 1, %s28
      %p34 = scmp.ge.s32.totalorder %s33, 1
      %s35 = scalar_select %p34, 0, %s33
      %s36 = sadd.s32 1, %s27
      %s37 = scalar_select %p34, %s36, %s27
      %p38 = scmp.ge.s32.totalorder %s37, 2
      %s39 = scalar_select %p38, 0, %s37
      %s40 = ssub.s32 %s27, %s39
      %s41 = ssub.s32 %s28, %s35
      %s42 = sor.u32 %s40, %s41
      %p43 = scmp.eq.s32.totalorder %s42, 0
      %s45 = sadd.s32 %s44, 1
      %s46 = scalar_select %p43, %s44, %s45
      %p49 = pneg %p43
      %p50 = scmp.eq.s32.totalorder %s20, 1
      %p51 = por %p49, %p50
      %p52 = scmp.ne.s32.totalorder %s44, %s47
      %p53 = scmp.eq.s32.totalorder %s20, 0
      %p54 = por %p52, %p53
      %p55 = scmp.ne.s32.totalorder %s44, %s47
      %p56 = scmp.eq.s32.totalorder %s25, 1
      %p57 = por %p55, %p56
      %p58 = scmp.ne.s32.totalorder %s47, %s48
      %p59 = scmp.eq.s32.totalorder %s25, 0
      %p60 = por %p58, %p59
      %p61 = scmp.ne.s32.totalorder %s47, %s48
      %p62 = scmp.eq.s32.totalorder %s26, 1
      %p63 = por %p61, %p62
      %p65 = scmp.ne.s32.totalorder %s48, %s64
      %p66 = scmp.eq.s32.totalorder %s26, 0
      %p67 = por %p65, %p66
      %s68 = ssub.s32 %s27, %s39
      %s69 = ssub.s32 %s28, %s35
      %s70 = sor.u32 %s68, %s69
      %p71 = scmp.eq.s32.totalorder %s70, 0
      %s73 = sadd.s32 %s72, 1
      %s74 = scalar_select %p71, %s72, %s73
      %p77 = pneg %p71
      %p78 = scmp.eq.s32.totalorder %s20, 1
      %p79 = por %p77, %p78
      %p80 = scmp.ne.s32.totalorder %s72, %s75
      %p81 = scmp.eq.s32.totalorder %s20, 0
      %p82 = por %p80, %p81
      %p83 = scmp.ne.s32.totalorder %s72, %s75
      %p84 = scmp.eq.s32.totalorder %s25, 1
      %p85 = por %p83, %p84
      %p86 = scmp.ne.s32.totalorder %s75, %s76
      %p87 = scmp.eq.s32.totalorder %s25, 0
      %p88 = por %p86, %p87
      %p89 = scmp.ne.s32.totalorder %s75, %s76
      %p90 = scmp.eq.s32.totalorder %s26, 1
      %p91 = por %p89, %p90
      %p93 = scmp.ne.s32.totalorder %s76, %s92
      %p94 = scmp.eq.s32.totalorder %s26, 0
      %p95 = por %p93, %p94
      %s97 = sadd.s32 %s96, 1
      %p100 = scmp.eq.s32.totalorder %s20, 1
      %p101 = scmp.ne.s32.totalorder %s96, %s98
      %p102 = scmp.eq.s32.totalorder %s20, 0
      %p103 = por %p101, %p102
      %p104 = scmp.ne.s32.totalorder %s96, %s98
      %p105 = scmp.eq.s32.totalorder %s25, 1
      %p106 = por %p104, %p105
      %p107 = scmp.ne.s32.totalorder %s98, %s99
      %p108 = scmp.eq.s32.totalorder %s25, 0
      %p109 = por %p107, %p108
      %p110 = scmp.ne.s32.totalorder %s98, %s99
      %p111 = scmp.eq.s32.totalorder %s26, 1
      %p112 = por %p110, %p111
      %p114 = scmp.ne.s32.totalorder %s99, %s113
      %p115 = scmp.eq.s32.totalorder %s26, 0
      %p116 = por %p114, %p115
      %s118 = sadd.s32 %s117, 1
      %p121 = scmp.eq.s32.totalorder %s20, 1
      %p122 = scmp.ne.s32.totalorder %s117, %s119
      %p123 = scmp.eq.s32.totalorder %s20, 0
      %p124 = por %p122, %p123
      %p125 = scmp.ne.s32.totalorder %s117, %s119
      %p126 = scmp.eq.s32.totalorder %s25, 1
      %p127 = por %p125, %p126
      %p128 = scmp.ne.s32.totalorder %s119, %s120
      %p129 = scmp.eq.s32.totalorder %s25, 0
      %p130 = por %p128, %p129
      %p131 = scmp.ne.s32.totalorder %s119, %s120
      %p132 = scmp.eq.s32.totalorder %s26, 1
      %p133 = por %p131, %p132
      %p135 = scmp.ne.s32.totalorder %s120, %s134
      %p136 = scmp.eq.s32.totalorder %s26, 0
      %p137 = por %p135, %p136
      %s139 = sadd.s32 %s138, 1
      %p142 = scmp.eq.s32.totalorder %s20, 1
      %p143 = scmp.ne.s32.totalorder %s138, %s140
      %p144 = scmp.eq.s32.totalorder %s20, 0
      %p145 = por %p143, %p144
      %p146 = scmp.ne.s32.totalorder %s138, %s140
      %p147 = scmp.eq.s32.totalorder %s25, 1
      %p148 = por %p146, %p147
      %p149 = scmp.ne.s32.totalorder %s140, %s141
      %p150 = scmp.eq.s32.totalorder %s25, 0
      %p151 = por %p149, %p150
      %p152 = scmp.ne.s32.totalorder %s140, %s141
      %p153 = scmp.eq.s32.totalorder %s26, 1
      %p154 = por %p152, %p153
      %p156 = scmp.ne.s32.totalorder %s141, %s155
      %p157 = scmp.eq.s32.totalorder %s26, 0
      %p158 = por %p156, %p157
      %s160 = sadd.s32 %s159, 1
      %p163 = scmp.eq.s32.totalorder %s20, 1
      %p164 = scmp.ne.s32.totalorder %s159, %s161
      %p165 = scmp.eq.s32.totalorder %s20, 0
      %p166 = por %p164, %p165
      %p167 = scmp.ne.s32.totalorder %s159, %s161
      %p168 = scmp.eq.s32.totalorder %s25, 1
      %p169 = por %p167, %p168
      %p170 = scmp.ne.s32.totalorder %s161, %s162
      %p171 = scmp.eq.s32.totalorder %s25, 0
      %p172 = por %p170, %p171
      %p173 = scmp.ne.s32.totalorder %s161, %s162
      %p174 = scmp.eq.s32.totalorder %s26, 1
      %p175 = por %p173, %p174
      %p177 = scmp.ne.s32.totalorder %s162, %s176
      %p178 = scmp.eq.s32.totalorder %s26, 0
      %p179 = por %p177, %p178
      %s180 = ssub.s32 %s27, %s39
      %s181 = ssub.s32 %s28, %s35
      %s182 = sor.u32 %s180, %s181
      %p183 = scmp.eq.s32.totalorder %s182, 0
      %s185 = sadd.s32 %s184, 1
      %s186 = scalar_select %p183, %s184, %s185
      %p189 = pneg %p183
      %p190 = scmp.eq.s32.totalorder %s20, 1
      %p191 = por %p189, %p190
      %p192 = scmp.ne.s32.totalorder %s184, %s187
      %p193 = scmp.eq.s32.totalorder %s20, 0
      %p194 = por %p192, %p193
      %p195 = scmp.ne.s32.totalorder %s184, %s187
      %p196 = scmp.eq.s32.totalorder %s25, 1
      %p197 = por %p195, %p196
      %p198 = scmp.ne.s32.totalorder %s187, %s188
      %p199 = scmp.eq.s32.totalorder %s25, 0
      %p200 = por %p198, %p199
      %p201 = scmp.ne.s32.totalorder %s187, %s188
      %p202 = scmp.eq.s32.totalorder %s26, 1
      %p203 = por %p201, %p202
      %p205 = scmp.ne.s32.totalorder %s188, %s204
      %p206 = scmp.eq.s32.totalorder %s26, 0
      %p207 = por %p205, %p206
      %s208 = ssub.s32 %s27, %s39
      %s209 = ssub.s32 %s28, %s35
      %s210 = sor.u32 %s208, %s209
      %p211 = scmp.eq.s32.totalorder %s210, 0
      %s213 = sadd.s32 %s212, 1
      %s214 = scalar_select %p211, %s212, %s213
      %p217 = pneg %p211
      %p218 = scmp.eq.s32.totalorder %s20, 1
      %p219 = por %p217, %p218
      %p220 = scmp.ne.s32.totalorder %s212, %s215
      %p221 = scmp.eq.s32.totalorder %s20, 0
      %p222 = por %p220, %p221
      %p223 = scmp.ne.s32.totalorder %s212, %s215
      %p224 = scmp.eq.s32.totalorder %s25, 1
      %p225 = por %p223, %p224
      %p226 = scmp.ne.s32.totalorder %s215, %s216
      %p227 = scmp.eq.s32.totalorder %s25, 0
      %p228 = por %p226, %p227
      %p229 = scmp.ne.s32.totalorder %s215, %s216
      %p230 = scmp.eq.s32.totalorder %s26, 1
      %p231 = por %p229, %p230
      %p233 = scmp.ne.s32.totalorder %s216, %s232
      %p234 = scmp.eq.s32.totalorder %s26, 0
      %p235 = por %p233, %p234
      %p236 = scmp.le.s32.totalorder 1, %s20
      %p237 = scmp.lt.s32.totalorder %s20, 3
      %p238 = pnand %p236, %p237
      %p239 = pneg %p238
      // Predicated region
      $region9: #{tpu_custom_call.1} parent=5 // pred_check
        _
      $region10: #{tpu_custom_call.1} parent=5 // pred_check_branch
        %241 = sbr.rel (%p238) target = $region12
      $region11: #{tpu_custom_call.1} parent=5 // pred_region
        %s242 = ssub.s32 %s20, 1
        // Predicated region
        $region13: #{tpu_custom_call.1} parent=11 // pred_check
          %p243 = pneg %p109
        $region14: #{tpu_custom_call.1} parent=11 // pred_check_branch
          %245 = sbr.rel (%p243) target = $region16
        $region15: #{tpu_custom_call.1} parent=11 // pred_region
          _
        $region16: #{tpu_custom_call.1} parent=11 // pred_fallthru
          _
        // Predicated region
        $region17: #{tpu_custom_call.1} parent=11 // pred_check
          %p246 = pneg %p130
        $region18: #{tpu_custom_call.1} parent=11 // pred_check_branch
          %248 = sbr.rel (%p246) target = $region20
        $region19: #{tpu_custom_call.1} parent=11 // pred_region
          _
        $region20: #{tpu_custom_call.1} parent=11 // pred_fallthru
          _
        // Predicated region
        $region21: #{tpu_custom_call.1} parent=11 // pred_check
          %p249 = pneg %p151
        $region22: #{tpu_custom_call.1} parent=11 // pred_check_branch
          %251 = sbr.rel (%p249) target = $region24
        $region23: #{tpu_custom_call.1} parent=11 // pred_region
          _
        $region24: #{tpu_custom_call.1} parent=11 // pred_fallthru
          _
        // Predicated region
        $region25: #{tpu_custom_call.1} parent=11 // pred_check
          %p252 = pneg %p172
        $region26: #{tpu_custom_call.1} parent=11 // pred_check_branch
          %254 = sbr.rel (%p252) target = $region28
        $region27: #{tpu_custom_call.1} parent=11 // pred_region
          _
        $region28: #{tpu_custom_call.1} parent=11 // pred_fallthru
          _
      $region12: #{tpu_custom_call.1} parent=5 // pred_fallthru
        _
      %p255 = scmp.lt.s32.totalorder %s20, 2
      // Predicated region
      $region29: #{tpu_custom_call.1} parent=5 // pred_check
        %p256 = pneg %p255
      $region30: #{tpu_custom_call.1} parent=5 // pred_check_branch
        %258 = sbr.rel (%p256) target = $region32
      $region31: #{tpu_custom_call.1} parent=5 // pred_region
        // Predicated region
        $region33: #{tpu_custom_call.1} parent=31 // pred_check
          %p259 = pneg %p54
        $region34: #{tpu_custom_call.1} parent=31 // pred_check_branch
          %261 = sbr.rel (%p259) target = $region36
        $region35: #{tpu_custom_call.1} parent=31 // pred_region
          %p262 = scmp.lt.s32.totalorder %s27, 1
          %s263 = scalar_select %p262, %s27, 1
          %p264 = scmp.lt.s32.totalorder %s28, 0
          %s265 = scalar_select %p264, %s28, 0
          %s266 = sadd.s32 %s265, %s263
          %s267 = smul.addr %s266, 8
          %s268 = scalar_lea.vmem %s0, %s267
        $region36: #{tpu_custom_call.1} parent=31 // pred_fallthru
          _
        // Predicated region
        $region37: #{tpu_custom_call.1} parent=31 // pred_check
          %p269 = pneg %p82
        $region38: #{tpu_custom_call.1} parent=31 // pred_check_branch
          %271 = sbr.rel (%p269) target = $region40
        $region39: #{tpu_custom_call.1} parent=31 // pred_region
          %p272 = scmp.lt.s32.totalorder %s27, 1
          %s273 = scalar_select %p272, %s27, 1
          %p274 = scmp.lt.s32.totalorder %s28, 0
          %s275 = scalar_select %p274, %s28, 0
          %s276 = sadd.s32 %s275, %s273
          %s277 = smul.addr %s276, 8
          %s278 = scalar_lea.vmem %s1, %s277
        $region40: #{tpu_custom_call.1} parent=31 // pred_fallthru
          _
      $region32: #{tpu_custom_call.1} parent=5 // pred_fallthru
        _
      %p279 = scmp.le.s32.totalorder 1, %s20
      %p280 = scmp.lt.s32.totalorder %s20, 3
      %p281 = pnand %p279, %p280
      %p282 = pneg %p281
      // Predicated region
      $region41: #{tpu_custom_call.1} parent=5 // pred_check
        _
      $region42: #{tpu_custom_call.1} parent=5 // pred_check_branch
        %284 = sbr.rel (%p281) target = $region44
      $region43: #{tpu_custom_call.1} parent=5 // pred_region
        %s285 = ssub.s32 %s20, 1
        %p286 = scmp.lt.s32.totalorder %s29, 1
        %s287 = scalar_select %p286, %s29, 1
        %p288 = scmp.lt.s32.totalorder %s30, 0
        %s289 = scalar_select %p288, %s30, 0
        %s290 = sadd.s32 %s289, %s287
        %s291 = smul.addr %s290, 8
        %s292 = scalar_lea.vmem %s0, %s291
        %p293 = pneg %p60
        %p294 = pneg %p57
        %p295 = scmp.lt.s32.totalorder %s29, 1
        %s296 = scalar_select %p295, %s29, 1
        %p297 = scmp.lt.s32.totalorder %s30, 0
        %s298 = scalar_select %p297, %s30, 0
        %s299 = sadd.s32 %s298, %s296
        %s300 = smul.addr %s299, 8
        %s301 = scalar_lea.vmem %s1, %s300
        %p302 = pneg %p88
        %p303 = pneg %p85
        %p304 = pneg %p109
        %p305 = pneg %p106
        %p306 = pneg %p130
        %p307 = pneg %p127
        %p308 = pneg %p151
        %p309 = pneg %p148
        %p310 = pneg %p172
        %p311 = pneg %p169
        %p312 = pneg %p200
        %p313 = pneg %p197
        %s314 = sand.u32 %s187, 1
        %s315 = scalar_lea.sflag [#allocation3], %s314
        %s316 = sand.u32 %s187, 1
        %s317 = smul.addr %s316, 8
        %s318 = scalar_lea.vmem [#allocation2], %s317
        %p319 = pneg %p228
        %p320 = pneg %p225
        %s321 = sand.u32 %s215, 1
        %s322 = scalar_lea.sflag [#allocation5], %s321
        %s323 = sand.u32 %s215, 1
        %s324 = smul.addr %s323, 8
        %s325 = scalar_lea.vmem [#allocation4], %s324
        %p326 = scmp.lt.s32.totalorder %s29, 1
        %s327 = scalar_select %p326, %s29, 1
        %p328 = scmp.lt.s32.totalorder %s30, 0
        %s329 = scalar_select %p328, %s30, 0
        %s330 = sadd.s32 %s329, %s327
        %s331 = smul.addr %s330, 8
        %s332 = scalar_lea.vmem %s0, %s331
        %p333 = scmp.lt.s32.totalorder %s29, 1
        %s334 = scalar_select %p333, %s29, 1
        %p335 = scmp.lt.s32.totalorder %s30, 0
        %s336 = scalar_select %p335, %s30, 0
        %s337 = sadd.s32 %s336, %s334
        %s338 = smul.addr %s337, 8
        %s339 = scalar_lea.vmem %s1, %s338
        %v340 = vld [vmem:[%s332] sm:$0xff]
        %v341 = vld [vmem:[%s2] sm:$0xff]
        %v342 = vld [vmem:[%s2 + $0x8] sm:$0xff]
        %v343 = vld [vmem:[%s2 + $0x10] sm:$0xff]
        %v344 = vld [vmem:[%s2 + $0x18] sm:$0xff]
        %v345 = vld [vmem:[%s4] sm:$0x1]
        %v347 = vlaneseq
        %v348 = vshrl.u32 %v347, 7
        %v349 = vsub.s32 0, %v348
        %v350 = vrot.slane %v345, %v349
        %vm352 = vcmask 261120
        %v354 = vsel %vm352, %v340, 0
        %356 = vmatprep.subr.mxu0 0.0
        %357 = vmatpush1.msra.mxu0 %v341
        %358 = vmatprep.subr.mxu0 0.0
        %359 = vmatpush1.msra.mxu0 %v342
        %360 = vmatprep.subr.mxu0 0.0
        %361 = vmatpush1.msra.mxu0 %v343
        %362 = vmatprep.subr.mxu0 0.0
        %363 = vmatpush1.msra.mxu0 %v344
        %364 = vmatprep.subr.mxu0 0.0
        %365 = vmatpush1.msra.mxu0 0.0
        %366 = vmatprep.subr.mxu0 0.0
        %367 = vmatpush1.msra.mxu0 0.0
        %368 = vmatprep.subr.mxu0 0.0
        %369 = vmatpush1.msra.mxu0 0.0
        %370 = vmatprep.subr.mxu0 0.0
        %371 = vmatpush1.msra.mxu0 0.0
        %372 = vmatprep.subr.mxu0 0.0
        %373 = vmatpush1.msra.mxu0 0.0
        %374 = vmatprep.subr.mxu0 0.0
        %375 = vmatpush1.msra.mxu0 0.0
        %376 = vmatprep.subr.mxu0 0.0
        %377 = vmatpush1.msra.mxu0 0.0
        %378 = vmatprep.subr.mxu0 0.0
        %379 = vmatpush1.msra.mxu0 0.0
        %380 = vmatprep.subr.mxu0 0.0
        %381 = vmatpush1.msra.mxu0 0.0
        %382 = vmatprep.subr.mxu0 0.0
        %383 = vmatpush1.msra.mxu0 0.0
        %384 = vmatprep.subr.mxu0 0.0
        %385 = vmatpush1.msra.mxu0 0.0
        %386 = vmatprep.subr.mxu0 0.0
        %387 = vmatpush1.msra.mxu0 0.0
        %388 = vmatprep.subr.mxu0 0.0
        %389 = vmatpush1.msra.mxu0 0.0
        %390 = vmatprep.subr.mxu0 0.0
        %391 = vmatpush1.msra.mxu0 0.0
        %392 = vmatprep.subr.mxu0 0.0
        %393 = vmatpush1.msra.mxu0 0.0
        %394 = vmatprep.subr.mxu0 0.0
        %395 = vmatpush1.msra.mxu0 0.0
        %396 = vmatprep.subr.mxu0 0.0
        %397 = vmatpush1.msra.mxu0 0.0
        %398 = vmatprep.subr.mxu0 0.0
        %399 = vmatpush1.msra.mxu0 0.0
        %400 = vmatprep.subr.mxu0 0.0
        %401 = vmatpush1.msra.mxu0 0.0
        %402 = vmatprep.subr.mxu0 0.0
        %403 = vmatpush1.msra.mxu0 0.0
        %404 = vmatprep.subr.mxu0 0.0
        %405 = vmatpush1.msra.mxu0 0.0
        %406 = vmatprep.subr.mxu0 0.0
        %407 = vmatpush1.msra.mxu0 0.0
        %408 = vmatprep.subr.mxu0 0.0
        %409 = vmatpush1.msra.mxu0 0.0
        %410 = vmatprep.subr.mxu0 0.0
        %411 = vmatpush1.msra.mxu0 0.0
        %412 = vmatprep.subr.mxu0 0.0
        %413 = vmatpush1.msra.mxu0 0.0
        %414 = vmatprep.subr.mxu0 0.0
        %415 = vmatpush1.msra.mxu0 0.0
        %416 = vmatprep.subr.mxu0 0.0
        %417 = vmatpush1.msra.mxu0 0.0
        %418 = vmatprep.subr.mxu0 0.0
        %419 = vmatpush1.msra.mxu0 0.0
        %420 = vmatprep.mubr.f32.mxu0 0.0
        %421 = vmatmul.mubr.f32.gmra.mrb[0].mxu0 %v354
        %v422 = vpop.f32.mrb[0].mxu0
        %v423 = vadd.f32 %v350, %v422
        %v424 = vpop.f32.mrb[0].mxu0
        %425 = vdwg.mxu0
        %vm426 = vcmask 130048
        %427 = vst.msk [vmem:[%s318] sm:$0xff] %vm426, %v423
        %v428 = vld [vmem:[%s339] sm:$0xff]
        %v429 = vld [vmem:[%s3] sm:$0xff]
        %v430 = vld [vmem:[%s3 + $0x8] sm:$0xff]
        %v431 = vld [vmem:[%s3 + $0x10] sm:$0xff]
        %v432 = vld [vmem:[%s3 + $0x18] sm:$0xff]
        %v433 = vld [vmem:[%s5] sm:$0x1]
        %v435 = vlaneseq
        %v436 = vshrl.u32 %v435, 7
        %v437 = vsub.s32 0, %v436
        %v438 = vrot.slane %v433, %v437
        %v441 = vsel %vm352, %v428, 0
        %443 = vmatprep.subr.mxu0 0.0
        %444 = vmatpush1.msra.mxu0 %v429
        %445 = vmatprep.subr.mxu0 0.0
        %446 = vmatpush1.msra.mxu0 %v430
        %447 = vmatprep.subr.mxu0 0.0
        %448 = vmatpush1.msra.mxu0 %v431
        %449 = vmatprep.subr.mxu0 0.0
        %450 = vmatpush1.msra.mxu0 %v432
        %451 = vmatprep.subr.mxu0 0.0
        %452 = vmatpush1.msra.mxu0 0.0
        %453 = vmatprep.subr.mxu0 0.0
        %454 = vmatpush1.msra.mxu0 0.0
        %455 = vmatprep.subr.mxu0 0.0
        %456 = vmatpush1.msra.mxu0 0.0
        %457 = vmatprep.subr.mxu0 0.0
        %458 = vmatpush1.msra.mxu0 0.0
        %459 = vmatprep.subr.mxu0 0.0
        %460 = vmatpush1.msra.mxu0 0.0
        %461 = vmatprep.subr.mxu0 0.0
        %462 = vmatpush1.msra.mxu0 0.0
        %463 = vmatprep.subr.mxu0 0.0
        %464 = vmatpush1.msra.mxu0 0.0
        %465 = vmatprep.subr.mxu0 0.0
        %466 = vmatpush1.msra.mxu0 0.0
        %467 = vmatprep.subr.mxu0 0.0
        %468 = vmatpush1.msra.mxu0 0.0
        %469 = vmatprep.subr.mxu0 0.0
        %470 = vmatpush1.msra.mxu0 0.0
        %471 = vmatprep.subr.mxu0 0.0
        %472 = vmatpush1.msra.mxu0 0.0
        %473 = vmatprep.subr.mxu0 0.0
        %474 = vmatpush1.msra.mxu0 0.0
        %475 = vmatprep.subr.mxu0 0.0
        %476 = vmatpush1.msra.mxu0 0.0
        %477 = vmatprep.subr.mxu0 0.0
        %478 = vmatpush1.msra.mxu0 0.0
        %479 = vmatprep.subr.mxu0 0.0
        %480 = vmatpush1.msra.mxu0 0.0
        %481 = vmatprep.subr.mxu0 0.0
        %482 = vmatpush1.msra.mxu0 0.0
        %483 = vmatprep.subr.mxu0 0.0
        %484 = vmatpush1.msra.mxu0 0.0
        %485 = vmatprep.subr.mxu0 0.0
        %486 = vmatpush1.msra.mxu0 0.0
        %487 = vmatprep.subr.mxu0 0.0
        %488 = vmatpush1.msra.mxu0 0.0
        %489 = vmatprep.subr.mxu0 0.0
        %490 = vmatpush1.msra.mxu0 0.0
        %491 = vmatprep.subr.mxu0 0.0
        %492 = vmatpush1.msra.mxu0 0.0
        %493 = vmatprep.subr.mxu0 0.0
        %494 = vmatpush1.msra.mxu0 0.0
        %495 = vmatprep.subr.mxu0 0.0
        %496 = vmatpush1.msra.mxu0 0.0
        %497 = vmatprep.subr.mxu0 0.0
        %498 = vmatpush1.msra.mxu0 0.0
        %499 = vmatprep.subr.mxu0 0.0
        %500 = vmatpush1.msra.mxu0 0.0
        %501 = vmatprep.subr.mxu0 0.0
        %502 = vmatpush1.msra.mxu0 0.0
        %503 = vmatprep.subr.mxu0 0.0
        %504 = vmatpush1.msra.mxu0 0.0
        %505 = vmatprep.subr.mxu0 0.0
        %506 = vmatpush1.msra.mxu0 0.0
        %507 = vmatprep.mubr.f32.mxu0 0.0
        %508 = vmatmul.mubr.f32.gmra.mrb[0].mxu0 %v441
        %v509 = vpop.f32.mrb[0].mxu0
        %v510 = vadd.f32 %v438, %v509
        %v511 = vpop.f32.mrb[0].mxu0
        %512 = vdwg.mxu0
        %513 = vst.msk [vmem:[%s325] sm:$0xff] %vm426, %v510
        %s514 = sand.u32 %s187, 1
        %s515 = scalar_lea.sflag [#allocation3], %s514
        %s516 = sand.u32 %s187, 1
        %s517 = smul.addr %s516, 8
        %s518 = scalar_lea.vmem [#allocation2], %s517
        %s519 = sand.u32 %s215, 1
        %s520 = scalar_lea.sflag [#allocation5], %s519
        %s521 = sand.u32 %s215, 1
        %s522 = smul.addr %s521, 8
        %s523 = scalar_lea.vmem [#allocation4], %s522
        // Predicated region
        $region45: #{tpu_custom_call.1} parent=43 // pred_check
          %p524 = pneg %p197
        $region46: #{tpu_custom_call.1} parent=43 // pred_check_branch
          %526 = sbr.rel (%p524) target = $region48
        $region47: #{tpu_custom_call.1} parent=43 // pred_region
          %s528 = ssub.s32 128, 128
          %529 = vsyncadd %s515, %s528
          %s530 = sadd.s32 %s30, %s29
          %s531 = smul.addr %s530, 128
          %s532 = scalar_lea.hbm %s6, %s531
          %s534 = sshll.u32 %s518, 4
          %s535 = int_to_ptr.vmem [resolvable:$true] %s534
          %537 = dma.vmem_to_hbm [thread:$0]  %s535, 128, %s532, %s515
        $region48: #{tpu_custom_call.1} parent=43 // pred_fallthru
          _
        // Predicated region
        $region49: #{tpu_custom_call.1} parent=43 // pred_check
          %p538 = pneg %p225
        $region50: #{tpu_custom_call.1} parent=43 // pred_check_branch
          %540 = sbr.rel (%p538) target = $region52
        $region51: #{tpu_custom_call.1} parent=43 // pred_region
          %s542 = ssub.s32 128, 128
          %543 = vsyncadd %s520, %s542
          %s544 = sadd.s32 %s30, %s29
          %s545 = smul.addr %s544, 128
          %s546 = scalar_lea.hbm %s7, %s545
          %s548 = sshll.u32 %s523, 4
          %s549 = int_to_ptr.vmem [resolvable:$true] %s548
          %551 = dma.vmem_to_hbm [thread:$0]  %s549, 128, %s546, %s520
        $region52: #{tpu_custom_call.1} parent=43 // pred_fallthru
          _
      $region44: #{tpu_custom_call.1} parent=5 // pred_fallthru
        _
      %p552 = scmp.le.s32.totalorder 2, %s20
      // Predicated region
      $region53: #{tpu_custom_call.1} parent=5 // pred_check
        %p553 = pneg %p552
      $region54: #{tpu_custom_call.1} parent=5 // pred_check_branch
        %555 = sbr.rel (%p553) target = $region56
      $region55: #{tpu_custom_call.1} parent=5 // pred_region
        %s556 = ssub.s32 %s20, 2
        // Predicated region
        $region57: #{tpu_custom_call.1} parent=55 // pred_check
          %p557 = pneg %p203
        $region58: #{tpu_custom_call.1} parent=55 // pred_check_branch
          %559 = sbr.rel (%p557) target = $region60
        $region59: #{tpu_custom_call.1} parent=55 // pred_region
          %s560 = sand.u32 %s188, 1
          %s561 = scalar_lea.sflag [#allocation3], %s560
          %s562 = sand.u32 %s188, 1
          %s563 = smul.addr %s562, 8
          %s564 = scalar_lea.vmem [#allocation2], %s563
          %565 = dma.done %s561, 128
        $region60: #{tpu_custom_call.1} parent=55 // pred_fallthru
          _
        // Predicated region
        $region61: #{tpu_custom_call.1} parent=55 // pred_check
          %p566 = pneg %p231
        $region62: #{tpu_custom_call.1} parent=55 // pred_check_branch
          %568 = sbr.rel (%p566) target = $region64
        $region63: #{tpu_custom_call.1} parent=55 // pred_region
          %s569 = sand.u32 %s216, 1
          %s570 = scalar_lea.sflag [#allocation5], %s569
          %s571 = sand.u32 %s216, 1
          %s572 = smul.addr %s571, 8
          %s573 = scalar_lea.vmem [#allocation4], %s572
          %574 = dma.done %s570, 128
        $region64: #{tpu_custom_call.1} parent=55 // pred_fallthru
          _
      $region56: #{tpu_custom_call.1} parent=5 // pred_fallthru
        _
    $region6: #{tpu_custom_call.1} parent=1 // loop_footer
      %s24 = sadd.s32 1, %s20
    $region7: #{tpu_custom_call.1} parent=1 // loop_footer_branch
      %19 = sbr.rel target = $region3
    $region8: #{tpu_custom_call.1} parent=1 // loop_exit
      _
    %575 = vsyncpa [#allocation3], 1
    %s576 = scalar_lea.sflag [#allocation3], 1
    %577 = vsyncpa %s576, 1
    %578 = vsyncpa [#allocation5], 1
    %s579 = scalar_lea.sflag [#allocation5], 1
    %580 = vsyncpa %s579, 1

</llo_original>
